<compile_context>
chip_gen: v5e
topology: v5e:2x2
jax: 0.10.0
libtpu: 0.0.40
codegen_flags: <defaults>
</compile_context>

<pallas_src>
import functools
import math

import jax
import jax.numpy as jnp
from jax.experimental import pallas as pl
from jax.experimental.pallas import tpu as pltpu

LANE = 128
TILE_ROWS_MAX = 4096   # (4096,128) f32 block = 2 MiB; 2 inputs x 2 buffers = 8 MiB VMEM
CHUNK_ROWS = 512       # in-kernel compute chunk: bounds temporaries to ~2 MiB


def _round_up(x, m):
    return (x + m - 1) // m * m


def _num_tensorcore_splits():
    """2 on dual-TensorCore devices (v4 / v5p / v7x), 1 on single-TC chips."""
    try:
        kind = jax.devices()[0].device_kind.lower()
    except Exception:
        return 1
    single_tc = ("v2", "v3", "v5 lite", "v5e", "v5lite", "v6")
    if any(s in kind for s in single_tc):
        return 1
    return 2


def _focal_loss_kernel(logits_ref, label_ref, out_ref, *,
                       gamma, alpha, rows, block_rows, chunk_rows, total_tiles):
    c = pl.program_id(0)                    # core split ("parallel")
    i = pl.program_id(1)                    # row-tile within the split ("arbitrary")
    t = c * pl.num_programs(1) + i          # linear tile index

    @pl.when(i == 0)
    def _init():
        out_ref[...] = jnp.zeros_like(out_ref)

    c0 = jnp.float32(1.0 - alpha)
    c1 = jnp.float32(2.0 * alpha - 1.0)

    def chunk_loss(x, y):
        # One exp + one log1p + one approx reciprocal per element (EUP slot);
        # everything else is plain VPU work.
        e = jnp.exp(-jnp.abs(x))                    # exp(-|x|) in (0, 1]
        lp1 = jnp.log1p(e)                          # log(1 + exp(-|x|))
        pos = x >= 0.0
        log_probs = jnp.where(pos, -lp1, x - lp1)   # log(sigmoid(x)), stable
        # log(1 - sigmoid(x)) == log_probs - x; it is folded into c0/c1 below.
        probs = jnp.where(pos, 1.0, e) * pl.reciprocal(1.0 + e, approx=True)
        d = jnp.abs(y - probs)
        if gamma == 2:
            pw = d * d                              # keep the pow off the EUP
        elif isinstance(gamma, int) and gamma >= 0:
            pw = d ** gamma                         # integer_pow -> multiplies
        else:
            pw = d ** jnp.float32(gamma)
        # loss = [alpha*y*log_p + (1-alpha)*(1-y)*(log_p - x)] * (-|y-p|^gamma)
        core = (c0 + c1 * y) * log_probs - c0 * (1.0 - y) * x
        return core * (-pw)

    n_chunks = block_rows // chunk_rows
    valid_rows = rows - t * block_rows      # rows of this tile holding real data

    def accumulate(masked):
        def body(j, acc):
            r0 = j * chunk_rows
            x = logits_ref[pl.ds(r0, chunk_rows), :].astype(jnp.float32)
            y = label_ref[pl.ds(r0, chunk_rows), :].astype(jnp.float32)
            l = chunk_loss(x, y)
            if masked:
                row = jax.lax.broadcasted_iota(jnp.int32, (chunk_rows, 1), 0)
                l = jnp.where(row + r0 < valid_rows, l, 0.0)
            # (chunk,128)->(chunk//8,8,128) is tile-aligned (metadata only); the
            # axis-0 sum is pure vreg adds into the tiny resident accumulator.
            return acc + l.reshape(chunk_rows // 8, 8, LANE).sum(axis=0)

        acc = jax.lax.fori_loop(0, n_chunks, body,
                                jnp.zeros((8, LANE), jnp.float32), unroll=True)
        out_ref[...] += acc

    is_real_tile = t < total_tiles          # skip duplicate clamped tiles entirely
    tile_is_full = valid_rows >= block_rows

    @pl.when(jnp.logical_and(is_real_tile, tile_is_full))
    def _full():
        accumulate(masked=False)

    @pl.when(jnp.logical_and(is_real_tile, jnp.logical_not(tile_is_full)))
    def _ragged():
        # Only the (at most one) block-ragged last tile pays for the row mask.
        accumulate(masked=True)


def bce_focal_loss_with_logits(logits, label, gamma=2, alpha=0.5,
                               reduction="mean"):
    """Pallas TPU implementation of BCE_FocalLoss_withLogits.forward."""
    assert logits.shape == label.shape
    assert reduction in ("mean", "sum")
    # TODO(synk): reduction='none' (per-element loss output) not wired up.

    n_elem = int(math.prod(logits.shape))
    assert n_elem > 0

    if not jnp.issubdtype(label.dtype, jnp.floating):
        label = label.astype(jnp.float32)

    flat_logits = logits.reshape(-1)        # metadata-only reshape
    flat_label = label.reshape(-1)

    # Pad only to a multiple of 8*128 so the (rows,128) slab reshape is legal
    # (a no-op for the common lane-aligned shapes).  Logits pad with 0, labels
    # with 0.5 => sigmoid(0)=0.5 => zero contribution for gamma > 0, so no
    # per-element tail mask is needed in the kernel.
    n_pad = _round_up(n_elem, 8 * LANE)
    pad_cnt = n_pad - n_elem
    if pad_cnt:
        flat_logits = jnp.pad(flat_logits, (0, pad_cnt))
        flat_label = jnp.pad(flat_label, (0, pad_cnt),
                             constant_values=jnp.asarray(0.5, flat_label.dtype))

    rows = n_pad // LANE                    # multiple of 8
    assert rows < 2 ** 31                   # row-level index math stays int32-safe

    if rows <= CHUNK_ROWS:
        block_rows = chunk_rows = rows      # single small tile, single chunk
    else:
        block_rows = min(TILE_ROWS_MAX, (rows // CHUNK_ROWS) * CHUNK_ROWS)
        chunk_rows = CHUNK_ROWS

    total_tiles = pl.cdiv(rows, block_rows)
    num_splits = _num_tensorcore_splits() if total_tiles > 1 else 1
    tiles_per_split = pl.cdiv(total_tiles, num_splits)

    logits2d = flat_logits.reshape(rows, LANE)
    label2d = flat_label.reshape(rows, LANE)

    def in_map(ci, ii):
        # Clamp so duplicate tiles of an uneven split stay in bounds; the kernel
        # skips their compute with pl.when.
        return (jnp.minimum(ci * tiles_per_split + ii, total_tiles - 1), 0)

    in_spec = pl.BlockSpec((block_rows, LANE), in_map)

    kernel = functools.partial(
        _focal_loss_kernel, gamma=gamma, alpha=alpha, rows=rows,
        block_rows=block_rows, chunk_rows=chunk_rows, total_tiles=total_tiles)

    partials = pl.pallas_call(
        kernel,
        out_shape=jax.ShapeDtypeStruct((num_splits * 8, LANE), jnp.float32),
        grid_spec=pltpu.PrefetchScalarGridSpec(
            num_scalar_prefetch=0,
            grid=(num_splits, tiles_per_split),
            in_specs=[in_spec, in_spec],
            out_specs=pl.BlockSpec((8, LANE), lambda ci, ii: (ci, 0)),
        ),
        compiler_params=pltpu.CompilerParams(
            dimension_semantics=("parallel", "arbitrary")),
    )(logits2d, label2d)

    total = jnp.sum(partials)               # tiny (<=16,128) reduce outside kernel
    if pad_cnt and gamma == 0:
        # With gamma == 0 each padded (x=0, y=0.5) element contributes exactly
        # 0.5*log(2) (independent of alpha); remove it analytically.
        total = total - jnp.float32(pad_cnt * 0.5 * math.log(2.0))
    if reduction == "mean":
        return total / jnp.float32(n_elem)
    return total


def _reference_loss(logits, label, gamma=2, alpha=0.5, reduction="mean"):
    """Pure-JAX reference mirroring the PyTorch module."""
    x = logits.astype(jnp.float32)
    y = label.astype(jnp.float32)
    probs = jax.nn.sigmoid(x)
    coeff = -(jnp.abs(y - probs) ** gamma)
    sp_neg = jnp.where(-x > 50.0, x, -jnp.log1p(jnp.exp(-x)))   # F.softplus(x, -1, 50)
    sp_pos = jnp.where(x > 50.0, x, jnp.log1p(jnp.exp(x)))      # F.softplus(x,  1, 50)
    log_probs = jnp.where(x >= 0.0, sp_neg, x - sp_pos)
    log_1_probs = jnp.where(x >= 0.0, -x + sp_neg, -sp_pos)
    loss = (y * alpha * log_probs + (1.0 - y) * (1.0 - alpha) * log_1_probs) * coeff
    return loss.mean() if reduction == "mean" else loss.sum()


if __name__ == "__main__":
    key = jax.random.PRNGKey(0)
    ks = jax.random.split(key, 8)
    # Tolerances account for pl.reciprocal(approx=True) inside the kernel.
    RTOL = 5e-3

    # 1) Small aligned NCHW case (no padding, no masks).
    shape = (2, 4, 16, 16)
    logits = jax.random.normal(ks[0], shape, dtype=jnp.float32) * 3.0
    label = jax.random.bernoulli(ks[1], p=0.5, shape=shape).astype(jnp.float32)
    loss = jax.block_until_ready(
        bce_focal_loss_with_logits(logits, label, gamma=2, alpha=0.5,
                                   reduction="mean"))
    ref = _reference_loss(logits, label, gamma=2, alpha=0.5, reduction="mean")
    assert jnp.allclose(loss, ref, rtol=RTOL, atol=1e-5), (loss, ref)

    # 2) Unaligned tail (exercises the 0.5-label padding) + 'sum' reduction.
    shape2 = (2, 3, 15, 15)
    logits2 = jax.random.normal(ks[2], shape2, dtype=jnp.float32) * 3.0
    label2 = jax.random.bernoulli(ks[3], p=0.5, shape=shape2).astype(jnp.float32)
    loss2 = jax.block_until_ready(
        bce_focal_loss_with_logits(logits2, label2, gamma=2, alpha=0.5,
                                   reduction="sum"))
    ref2 = _reference_loss(logits2, label2, gamma=2, alpha=0.5, reduction="sum")
    assert jnp.allclose(loss2, ref2, rtol=RTOL, atol=1e-3), (loss2, ref2)

    # 3) Multi-tile case: exercises the chunked inner loop, the block-ragged
    #    last tile's row mask, the core split, and alpha != 0.5.
    shape3 = (4, 19, 96, 96)
    logits3 = jax.random.normal(ks[4], shape3, dtype=jnp.float32) * 3.0
    label3 = jax.random.bernoulli(ks[5], p=0.3, shape=shape3).astype(jnp.float32)
    loss3 = jax.block_until_ready(
        bce_focal_loss_with_logits(logits3, label3, gamma=2, alpha=0.25,
                                   reduction="mean"))
    ref3 = _reference_loss(logits3, label3, gamma=2, alpha=0.25, reduction="mean")
    assert jnp.allclose(loss3, ref3, rtol=RTOL, atol=1e-5), (loss3, ref3)

    # 4) bf16 inputs with an unaligned tail (native-dtype HBM streaming path).
    shape4 = (3, 5, 11, 13)
    logits4 = (jax.random.normal(ks[6], shape4, dtype=jnp.float32) * 3.0
               ).astype(jnp.bfloat16)
    label4 = jax.random.bernoulli(ks[7], p=0.5, shape=shape4).astype(jnp.bfloat16)
    loss4 = jax.block_until_ready(
        bce_focal_loss_with_logits(logits4, label4, gamma=2, alpha=0.5,
                                   reduction="mean"))
    ref4 = _reference_loss(logits4, label4, gamma=2, alpha=0.5, reduction="mean")
    assert jnp.allclose(loss4, ref4, rtol=RTOL, atol=1e-4), (loss4, ref4)

    print("KERNEL_OK")
</pallas_src>

<mosaic_0001>
module attributes {stable_mosaic.version = 11 : i64} {
  func.func @_focal_loss_kernel(%arg0: i32, %arg1: i32, %arg2: memref<16x128xf32, #tpu.memory_space<vmem>>, %arg3: memref<16x128xf32, #tpu.memory_space<vmem>>, %arg4: memref<8x128xf32, #tpu.memory_space<vmem>>) attributes {dimension_semantics = [#tpu.dimension_semantics<parallel>, #tpu.dimension_semantics<arbitrary>], iteration_bounds = array<i64: 1, 1>, scalar_prefetch = 0 : i64, scratch_operands = 0 : i64, tpu.core_type = #tpu.core_type<tc>, window_params = [{transform_indices = @transform_0, window_bounds = array<i64: 16, 128>}, {transform_indices = @transform_1, window_bounds = array<i64: 16, 128>}, {transform_indices = @transform_2, window_bounds = array<i64: 8, 128>}]} {
    %c1_i32 = arith.constant 1 : i32
    %0 = arith.muli %arg0, %c1_i32 : i32
    %1 = arith.addi %0, %arg1 : i32
    %c0_i32 = arith.constant 0 : i32
    %2 = arith.cmpi eq, %arg1, %c0_i32 : i32
    %3 = arith.extui %2 : i1 to i32
    %c0_i32_0 = arith.constant 0 : i32
    %4 = arith.cmpi ne, %3, %c0_i32_0 : i32
    scf.if %4 {
      %cst_9 = arith.constant 0.000000e+00 : f32
      %16 = vector.broadcast %cst_9 : f32 to vector<8x128xf32>
      %c0 = arith.constant 0 : index
      %c0_10 = arith.constant 0 : index
      %17 = vector.load %arg4[%c0, %c0_10] : memref<8x128xf32, #tpu.memory_space<vmem>>, vector<8x128xf32>
      tpu.vector_store %arg4[%c0, %c0_10], %16 {strides = array<i32>} : memref<8x128xf32, #tpu.memory_space<vmem>>, vector<8x128xf32>,
    } else {
    }
    %c16_i32 = arith.constant 16 : i32
    %5 = arith.muli %1, %c16_i32 : i32
    %c16_i32_1 = arith.constant 16 : i32
    %6 = arith.subi %c16_i32_1, %5 : i32
    %c1_i32_2 = arith.constant 1 : i32
    %7 = arith.cmpi slt, %1, %c1_i32_2 : i32
    %c16_i32_3 = arith.constant 16 : i32
    %8 = arith.cmpi sge, %6, %c16_i32_3 : i32
    %9 = arith.andi %7, %8 : i1
    %10 = arith.extui %9 : i1 to i32
    %cst = arith.constant 0.000000e+00 : f32
    %cst_4 = arith.constant 5.000000e-01 : f32
    %c0_i32_5 = arith.constant 0 : i32
    %11 = arith.cmpi ne, %10, %c0_i32_5 : i32
    scf.if %11 {
      %cst_9 = arith.constant 0.000000e+00 : f32
      %16 = vector.broadcast %cst_9 : f32 to vector<8x128xf32>
      %c0_i32_10 = arith.constant 0 : i32
      %c16_i32_11 = arith.constant 16 : i32
      %17 = arith.muli %c0_i32_10, %c16_i32_11 : i32
      %18 = arith.index_cast %17 : i32 to index
      %c0 = arith.constant 0 : index
      %19 = vector.load %arg2[%18, %c0] : memref<16x128xf32, #tpu.memory_space<vmem>>, vector<16x128xf32>
      %20 = arith.index_cast %17 : i32 to index
      %c0_12 = arith.constant 0 : index
      %21 = vector.load %arg3[%20, %c0_12] : memref<16x128xf32, #tpu.memory_space<vmem>>, vector<16x128xf32>
      %22 = math.absf %19 : vector<16x128xf32>
      %cst_13 = arith.constant 0.000000e+00 : f32
      %23 = vector.broadcast %cst_13 : f32 to vector<16x128xf32>
      %24 = arith.subf %23, %22 : vector<16x128xf32>
      %25 = math.exp %24 : vector<16x128xf32>
      %26 = math.log1p %25 : vector<16x128xf32>
      %cst_14 = arith.constant 0.000000e+00 : f32
      %27 = vector.broadcast %cst_14 : f32 to vector<16x128xf32>
      %28 = arith.cmpf oge, %19, %27 : vector<16x128xf32>
      %cst_15 = arith.constant 0.000000e+00 : f32
      %29 = vector.broadcast %cst_15 : f32 to vector<16x128xf32>
      %30 = arith.subf %29, %26 : vector<16x128xf32>
      %31 = arith.subf %19, %26 : vector<16x128xf32>
      %32 = arith.select %28, %30, %31 : vector<16x128xi1>, vector<16x128xf32>
      %cst_16 = arith.constant 1.000000e+00 : f32
      %33 = vector.broadcast %cst_16 : f32 to vector<16x128xf32>
      %34 = arith.select %28, %33, %25 : vector<16x128xi1>, vector<16x128xf32>
      %cst_17 = arith.constant 1.000000e+00 : f32
      %35 = vector.broadcast %cst_17 : f32 to vector<16x128xf32>
      %36 = arith.addf %35, %25 : vector<16x128xf32>
      %37 = tpu.reciprocal %36 {approx = true} : vector<16x128xf32> -> vector<16x128xf32>
      %38 = arith.mulf %34, %37 : vector<16x128xf32>
      %39 = arith.subf %21, %38 : vector<16x128xf32>
      %40 = math.absf %39 : vector<16x128xf32>
      %41 = arith.mulf %40, %40 : vector<16x128xf32>
      %42 = vector.broadcast %cst : f32 to vector<16x128xf32>
      %43 = arith.mulf %42, %21 : vector<16x128xf32>
      %44 = vector.broadcast %cst_4 : f32 to vector<16x128xf32>
      %45 = arith.addf %44, %43 : vector<16x128xf32>
      %46 = arith.mulf %45, %32 : vector<16x128xf32>
      %cst_18 = arith.constant 1.000000e+00 : f32
      %47 = vector.broadcast %cst_18 : f32 to vector<16x128xf32>
      %48 = arith.subf %47, %21 : vector<16x128xf32>
      %49 = vector.broadcast %cst_4 : f32 to vector<16x128xf32>
      %50 = arith.mulf %49, %48 : vector<16x128xf32>
      %51 = arith.mulf %50, %19 : vector<16x128xf32>
      %52 = arith.subf %46, %51 : vector<16x128xf32>
      %cst_19 = arith.constant 0.000000e+00 : f32
      %53 = vector.broadcast %cst_19 : f32 to vector<16x128xf32>
      %54 = arith.subf %53, %41 : vector<16x128xf32>
      %55 = arith.mulf %52, %54 : vector<16x128xf32>
      %56 = vector.shape_cast %55 : vector<16x128xf32> to vector<2x8x128xf32>
      %cst_20 = arith.constant dense<0.000000e+00> : vector<8x128xf32>
      %57 = vector.multi_reduction <add>, %56, %cst_20 [0] : vector<2x8x128xf32> to vector<8x128xf32>
      %58 = arith.addf %16, %57 : vector<8x128xf32>
      %c1_i32_21 = arith.constant 1 : i32
      %c0_22 = arith.constant 0 : index
      %c0_23 = arith.constant 0 : index
      %59 = vector.load %arg4[%c0_22, %c0_23] : memref<8x128xf32, #tpu.memory_space<vmem>>, vector<8x128xf32>
      %60 = arith.addf %59, %58 : vector<8x128xf32>
      %c0_24 = arith.constant 0 : index
      %c0_25 = arith.constant 0 : index
      %61 = vector.load %arg4[%c0_24, %c0_25] : memref<8x128xf32, #tpu.memory_space<vmem>>, vector<8x128xf32>
      tpu.vector_store %arg4[%c0_24, %c0_25], %60 {strides = array<i32>} : memref<8x128xf32, #tpu.memory_space<vmem>>, vector<8x128xf32>,
    } else {
    }
    %true = arith.constant true
    %12 = arith.xori %8, %true : i1
    %13 = arith.andi %7, %12 : i1
    %14 = arith.extui %13 : i1 to i32
    %cst_6 = arith.constant 0.000000e+00 : f32
    %cst_7 = arith.constant 5.000000e-01 : f32
    %c0_i32_8 = arith.constant 0 : i32
    %15 = arith.cmpi ne, %14, %c0_i32_8 : i32
    scf.if %15 {
      %cst_9 = arith.constant 0.000000e+00 : f32
      %16 = vector.broadcast %cst_9 : f32 to vector<8x128xf32>
      %c0_i32_10 = arith.constant 0 : i32
      %c16_i32_11 = arith.constant 16 : i32
      %17 = arith.muli %c0_i32_10, %c16_i32_11 : i32
      %18 = arith.index_cast %17 : i32 to index
      %c0 = arith.constant 0 : index
      %19 = vector.load %arg2[%18, %c0] : memref<16x128xf32, #tpu.memory_space<vmem>>, vector<16x128xf32>
      %20 = arith.index_cast %17 : i32 to index
      %c0_12 = arith.constant 0 : index
      %21 = vector.load %arg3[%20, %c0_12] : memref<16x128xf32, #tpu.memory_space<vmem>>, vector<16x128xf32>
      %22 = math.absf %19 : vector<16x128xf32>
      %cst_13 = arith.constant 0.000000e+00 : f32
      %23 = vector.broadcast %cst_13 : f32 to vector<16x128xf32>
      %24 = arith.subf %23, %22 : vector<16x128xf32>
      %25 = math.exp %24 : vector<16x128xf32>
      %26 = math.log1p %25 : vector<16x128xf32>
      %cst_14 = arith.constant 0.000000e+00 : f32
      %27 = vector.broadcast %cst_14 : f32 to vector<16x128xf32>
      %28 = arith.cmpf oge, %19, %27 : vector<16x128xf32>
      %cst_15 = arith.constant 0.000000e+00 : f32
      %29 = vector.broadcast %cst_15 : f32 to vector<16x128xf32>
      %30 = arith.subf %29, %26 : vector<16x128xf32>
      %31 = arith.subf %19, %26 : vector<16x128xf32>
      %32 = arith.select %28, %30, %31 : vector<16x128xi1>, vector<16x128xf32>
      %cst_16 = arith.constant 1.000000e+00 : f32
      %33 = vector.broadcast %cst_16 : f32 to vector<16x128xf32>
      %34 = arith.select %28, %33, %25 : vector<16x128xi1>, vector<16x128xf32>
      %cst_17 = arith.constant 1.000000e+00 : f32
      %35 = vector.broadcast %cst_17 : f32 to vector<16x128xf32>
      %36 = arith.addf %35, %25 : vector<16x128xf32>
      %37 = tpu.reciprocal %36 {approx = true} : vector<16x128xf32> -> vector<16x128xf32>
      %38 = arith.mulf %34, %37 : vector<16x128xf32>
      %39 = arith.subf %21, %38 : vector<16x128xf32>
      %40 = math.absf %39 : vector<16x128xf32>
      %41 = arith.mulf %40, %40 : vector<16x128xf32>
      %42 = vector.broadcast %cst_6 : f32 to vector<16x128xf32>
      %43 = arith.mulf %42, %21 : vector<16x128xf32>
      %44 = vector.broadcast %cst_7 : f32 to vector<16x128xf32>
      %45 = arith.addf %44, %43 : vector<16x128xf32>
      %46 = arith.mulf %45, %32 : vector<16x128xf32>
      %cst_18 = arith.constant 1.000000e+00 : f32
      %47 = vector.broadcast %cst_18 : f32 to vector<16x128xf32>
      %48 = arith.subf %47, %21 : vector<16x128xf32>
      %49 = vector.broadcast %cst_7 : f32 to vector<16x128xf32>
      %50 = arith.mulf %49, %48 : vector<16x128xf32>
      %51 = arith.mulf %50, %19 : vector<16x128xf32>
      %52 = arith.subf %46, %51 : vector<16x128xf32>
      %cst_19 = arith.constant 0.000000e+00 : f32
      %53 = vector.broadcast %cst_19 : f32 to vector<16x128xf32>
      %54 = arith.subf %53, %41 : vector<16x128xf32>
      %55 = arith.mulf %52, %54 : vector<16x128xf32>
      %56 = tpu.iota {dimensions = array<i32: 0>} : vector<16x1xi32>
      %57 = vector.broadcast %17 : i32 to vector<16x1xi32>
      %58 = arith.addi %56, %57 : vector<16x1xi32>
      %59 = vector.broadcast %6 : i32 to vector<16x1xi32>
      %60 = arith.cmpi slt, %58, %59 : vector<16x1xi32>
      %cst_20 = arith.constant 0.000000e+00 : f32
      %61 = vector.shape_cast %60 : vector<16x1xi1> to vector<16x1xi1>
      %62 = vector.broadcast %61 : vector<16x1xi1> to vector<16x128xi1>
      %63 = vector.broadcast %cst_20 : f32 to vector<16x128xf32>
      %64 = arith.select %62, %55, %63 : vector<16x128xi1>, vector<16x128xf32>
      %65 = vector.shape_cast %64 : vector<16x128xf32> to vector<2x8x128xf32>
      %cst_21 = arith.constant dense<0.000000e+00> : vector<8x128xf32>
      %66 = vector.multi_reduction <add>, %65, %cst_21 [0] : vector<2x8x128xf32> to vector<8x128xf32>
      %67 = arith.addf %16, %66 : vector<8x128xf32>
      %c1_i32_22 = arith.constant 1 : i32
      %c0_23 = arith.constant 0 : index
      %c0_24 = arith.constant 0 : index
      %68 = vector.load %arg4[%c0_23, %c0_24] : memref<8x128xf32, #tpu.memory_space<vmem>>, vector<8x128xf32>
      %69 = arith.addf %68, %67 : vector<8x128xf32>
      %c0_25 = arith.constant 0 : index
      %c0_26 = arith.constant 0 : index
      %70 = vector.load %arg4[%c0_25, %c0_26] : memref<8x128xf32, #tpu.memory_space<vmem>>, vector<8x128xf32>
      tpu.vector_store %arg4[%c0_25, %c0_26], %69 {strides = array<i32>} : memref<8x128xf32, #tpu.memory_space<vmem>>, vector<8x128xf32>,
    } else {
    }
    return
  }
  func.func @transform_0(%arg0: i32, %arg1: i32) -> (i32, i32) {
    %c1_i32 = arith.constant 1 : i32
    %0 = arith.muli %arg0, %c1_i32 : i32
    %1 = arith.addi %0, %arg1 : i32
    %c0_i32 = arith.constant 0 : i32
    %2 = arith.minsi %1, %c0_i32 : i32
    %c0_i32_0 = arith.constant 0 : i32
    %c0_i32_1 = arith.constant 0 : i32
    return %2, %c0_i32_0 : i32, i32
  }
  func.func @transform_1(%arg0: i32, %arg1: i32) -> (i32, i32) {
    %c1_i32 = arith.constant 1 : i32
    %0 = arith.muli %arg0, %c1_i32 : i32
    %1 = arith.addi %0, %arg1 : i32
    %c0_i32 = arith.constant 0 : i32
    %2 = arith.minsi %1, %c0_i32 : i32
    %c0_i32_0 = arith.constant 0 : i32
    %c0_i32_1 = arith.constant 0 : i32
    return %2, %c0_i32_0 : i32, i32
  }
  func.func @transform_2(%arg0: i32, %arg1: i32) -> (i32, i32) {
    %c0_i32 = arith.constant 0 : i32
    %c0_i32_0 = arith.constant 0 : i32
    return %arg0, %c0_i32 : i32, i32
  }
}

</mosaic_0001>

<llo_original>
// kernel: tpu_custom_call.1
$region0: #{tpu_custom_call.1}
  #allocation0 [shape = 'u32[]', space=smem, size = 0x4, offset = 0x4, fixed_abs, tag = 'smem constant byte address 0x4 - core index']
  #allocation1 [shape = 'u32[72,128]{1,0:T(1,128)}', space=vmem, size = 0x9000, scoped, tag = 'internal scratch']
  %s0 = inlined_call_operand.hbm [shape: f32[16,128], index: 0, kind: input, shape index: {}]
  %s1 = inlined_call_operand.hbm [shape: f32[16,128], index: 1, kind: input, shape index: {}]
  %s2 = inlined_call_operand.hbm [shape: f32[8,128], index: 2, kind: output, shape index: {}]
  %s3 = sld [smem:[#allocation0]]
  $region38: #{tpu_custom_call.1} parent=0
    _
  %s5 = ssub.s32 1, %s3
  %s6 = scalar_select 0, %s5, %s3
  $region1: #{tpu_custom_call.1} parent=0
    #allocation2 [shape = 'u8[8192]{0}', space=vmem, size = 0x2000, scoped, tag = 'input window, operand 0, single buffered']
    #allocation3 [shape = 's32[1]{0}', space=sflag, size = 0x4, scoped, tag = 'scoped memory for tpu_custom_call.1']
    #allocation4 [shape = 's32[1]{0}', space=sflag, size = 0x4, scoped, tag = 'scoped memory for tpu_custom_call.1']
    #allocation5 [shape = 'u8[8192]{0}', space=vmem, size = 0x2000, scoped, tag = 'input window, operand 1, single buffered']
    #allocation6 [shape = 's32[1]{0}', space=sflag, size = 0x4, scoped, tag = 'scoped memory for tpu_custom_call.1']
    #allocation7 [shape = 'u8[4096]{0}', space=vmem, size = 0x1000, scoped, tag = 'output window, operand 0, single buffered']
    %7 = vsyncpa [#allocation3], 0
    %8 = vsyncpa [#allocation6], 0
    %9 = vsyncpa [#allocation4], 0
    // Predicated region
    $region2: #{tpu_custom_call.1} parent=1 // pred_check
      _
    $region3: #{tpu_custom_call.1} parent=1 // pred_check_branch
      %11 = sbr.rel (0) target = $region5
    $region4: #{tpu_custom_call.1} parent=1 // pred_region
      %s12 = sadd.s32 0, 0
      %p13 = scmp.lt.s32.totalorder %s12, 0
      %s14 = scalar_select %p13, %s12, 0
      %s15 = smul.u32 2, %s14
      %17 = vsyncadd [#allocation3], 0
      %s18 = smul.addr %s15, 8
      %s19 = scalar_lea.hbm %s0, %s18
      %s20 = sshll.u32 %s19, 4
      %s21 = int_to_ptr.hbm [resolvable:$true] %s20
      %s22 = sshll.u32 [#allocation2], 4
      %s23 = int_to_ptr.vmem [resolvable:$true] %s22
      %28 = dma.hbm_to_vmem [thread:$0]  %s21, 256, %s23, [#allocation3], 128, 128, 8
    $region5: #{tpu_custom_call.1} parent=1 // pred_fallthru
      _
    // Predicated region
    $region6: #{tpu_custom_call.1} parent=1 // pred_check
      _
    $region7: #{tpu_custom_call.1} parent=1 // pred_check_branch
      %30 = sbr.rel (0) target = $region9
    $region8: #{tpu_custom_call.1} parent=1 // pred_region
      %s31 = sadd.s32 0, 0
      %p32 = scmp.lt.s32.totalorder %s31, 0
      %s33 = scalar_select %p32, %s31, 0
      %s34 = smul.u32 2, %s33
      %36 = vsyncadd [#allocation6], 0
      %s37 = smul.addr %s34, 8
      %s38 = scalar_lea.hbm %s1, %s37
      %s39 = sshll.u32 %s38, 4
      %s40 = int_to_ptr.hbm [resolvable:$true] %s39
      %s41 = sshll.u32 [#allocation5], 4
      %s42 = int_to_ptr.vmem [resolvable:$true] %s41
      %47 = dma.hbm_to_vmem [thread:$0]  %s40, 256, %s42, [#allocation6], 128, 128, 8
    $region9: #{tpu_custom_call.1} parent=1 // pred_fallthru
      _
    // Predicated region
    $region10: #{tpu_custom_call.1} parent=1 // pred_check
      _
    $region11: #{tpu_custom_call.1} parent=1 // pred_check_branch
      %49 = sbr.rel (0) target = $region13
    $region12: #{tpu_custom_call.1} parent=1 // pred_region
      %51 = dma.done [#allocation3], 256
    $region13: #{tpu_custom_call.1} parent=1 // pred_fallthru
      _
    // Predicated region
    $region14: #{tpu_custom_call.1} parent=1 // pred_check
      _
    $region15: #{tpu_custom_call.1} parent=1 // pred_check_branch
      %53 = sbr.rel (0) target = $region17
    $region16: #{tpu_custom_call.1} parent=1 // pred_region
      %55 = dma.done [#allocation6], 256
    $region17: #{tpu_custom_call.1} parent=1 // pred_fallthru
      _
    %s56 = sadd.s32 0, 0
    %p57 = scmp.lt.s32.totalorder %s56, 0
    %s58 = scalar_select %p57, %s56, 0
    %s59 = smul.u32 2, %s58
    %s60 = sadd.s32 0, 0
    %p61 = scmp.lt.s32.totalorder %s60, 0
    %s62 = scalar_select %p61, %s60, 0
    %s63 = smul.u32 2, %s62
    %s64 = sadd.s32 0, 0
    %p65 = scmp.eq.s32.totalorder 0, 0
    // Predicated region
    $region18: #{tpu_custom_call.1} parent=1 // pred_check
      %p66 = pneg %p65
    $region19: #{tpu_custom_call.1} parent=1 // pred_check_branch
      %68 = sbr.rel (%p66) target = $region21
    $region20: #{tpu_custom_call.1} parent=1 // pred_region
      %69 = vst [vmem:[#allocation7] sm:$0xff] 0.0
    $region21: #{tpu_custom_call.1} parent=1 // pred_fallthru
      _
    %s70 = smul.u32 %s64, 16
    %s71 = ssub.s32 16, %s70
    %p72 = scmp.lt.s32.totalorder %s64, 1
    %p73 = scmp.ge.s32.totalorder %s71, 16
    %p74 = pnand %p72, %p73
    %p75 = pneg %p74
    // Predicated region
    $region22: #{tpu_custom_call.1} parent=1 // pred_check
      _
    $region23: #{tpu_custom_call.1} parent=1 // pred_check_branch
      %77 = sbr.rel (%p74) target = $region25
    $region24: #{tpu_custom_call.1} parent=1 // pred_region
      %v78 = vld [vmem:[#allocation2] sm:$0xff]
      %v79 = vld [vmem:[#allocation2 + $0x8] sm:$0xff]
      %v80 = vld [vmem:[#allocation5] sm:$0xff]
      %v81 = vld [vmem:[#allocation5 + $0x8] sm:$0xff]
      %v82 = vand.u32 2147483647, %v78
      %v83 = vand.u32 2147483647, %v79
      %v84 = vsub.f32 0.0, %v82
      %v85 = vsub.f32 0.0, %v83
      %v86 = vmul.f32 %v84, 1.442695
      %v87 = vpow.pop %v86
      %v88 = vmul.f32 %v85, 1.442695
      %v89 = vpow.pop %v88
      %v90 = vadd.f32 %v87, 1.0
      %v91 = vlog2.pop %v90
      %v92 = vmul.f32 %v91, 0.6931472
      %v93 = vmul.f32 -0.5, %v87
      %v94 = vadd.f32 %v93, 1.0
      %v95 = vmul.f32 %v94, %v87
      %v96 = vand.u32 2147483647, %v87
      %vm97 = vcmp.lt.f32.partialorder %v96, 0.0004427343
      %v98 = vsel %vm97, %v95, %v92
      %v99 = vadd.f32 %v89, 1.0
      %v100 = vlog2.pop %v99
      %v101 = vmul.f32 %v100, 0.6931472
      %v102 = vmul.f32 -0.5, %v89
      %v103 = vadd.f32 %v102, 1.0
      %v104 = vmul.f32 %v103, %v89
      %v105 = vand.u32 2147483647, %v89
      %vm106 = vcmp.lt.f32.partialorder %v105, 0.0004427343
      %v107 = vsel %vm106, %v104, %v101
      %vm108 = vcmp.ge.f32.partialorder %v78, 0.0
      %vm109 = vcmp.ge.f32.partialorder %v79, 0.0
      %v110 = vsub.f32 0.0, %v98
      %v111 = vsub.f32 0.0, %v107
      %v112 = vsub.f32 %v78, %v98
      %v113 = vsub.f32 %v79, %v107
      %v114 = vsel %vm108, %v110, %v112
      %v115 = vsel %vm109, %v111, %v113
      %v116 = vsel %vm108, 1.0, %v87
      %v117 = vsel %vm109, 1.0, %v89
      %v118 = vadd.f32 %v87, 1.0
      %v119 = vadd.f32 %v89, 1.0
      %v120 = vrcp.pop %v118
      %v121 = vrcp.pop %v119
      %v122 = vmul.f32 %v116, %v120
      %v123 = vmul.f32 %v117, %v121
      %v124 = vsub.f32 %v80, %v122
      %v125 = vsub.f32 %v81, %v123
      %v126 = vand.u32 2147483647, %v124
      %v127 = vand.u32 2147483647, %v125
      %v128 = vmul.f32 %v126, %v126
      %v129 = vmul.f32 %v127, %v127
      %v130 = vmul.f32 %v80, 0.0
      %v131 = vmul.f32 %v81, 0.0
      %v132 = vadd.f32 %v130, 0.5
      %v133 = vadd.f32 %v131, 0.5
      %v134 = vmul.f32 %v132, %v114
      %v135 = vmul.f32 %v133, %v115
      %v136 = vsub.f32 1.0, %v80
      %v137 = vsub.f32 1.0, %v81
      %v138 = vmul.f32 %v136, 0.5
      %v139 = vmul.f32 %v137, 0.5
      %v140 = vmul.f32 %v138, %v78
      %v141 = vmul.f32 %v139, %v79
      %v142 = vsub.f32 %v134, %v140
      %v143 = vsub.f32 %v135, %v141
      %v144 = vsub.f32 0.0, %v128
      %v145 = vsub.f32 0.0, %v129
      %v146 = vmul.f32 %v142, %v144
      %v147 = vmul.f32 %v143, %v145
      %v148 = vadd.f32 %v146, %v147
      %v149 = vadd.f32 %v148, 0.0
      %v150 = vld [vmem:[#allocation7] sm:$0xff]
      %v151 = vadd.f32 %v150, %v149
      %152 = vst [vmem:[#allocation7] sm:$0xff] %v151
    $region25: #{tpu_custom_call.1} parent=1 // pred_fallthru
      _
    %p153 = scmp.lt.s32.totalorder %s71, 16
    %p154 = pnand %p72, %p153
    %p155 = pneg %p154
    // Predicated region
    $region26: #{tpu_custom_call.1} parent=1 // pred_check
      _
    $region27: #{tpu_custom_call.1} parent=1 // pred_check_branch
      %157 = sbr.rel (%p154) target = $region29
    $region28: #{tpu_custom_call.1} parent=1 // pred_region
      %v158 = vld [vmem:[#allocation2] sm:$0xff]
      %v159 = vld [vmem:[#allocation2 + $0x8] sm:$0xff]
      %v160 = vld [vmem:[#allocation5] sm:$0xff]
      %v161 = vld [vmem:[#allocation5 + $0x8] sm:$0xff]
      %v162 = vand.u32 2147483647, %v158
      %v163 = vand.u32 2147483647, %v159
      %v164 = vsub.f32 0.0, %v162
      %v165 = vsub.f32 0.0, %v163
      %v166 = vmul.f32 %v164, 1.442695
      %v167 = vpow.pop %v166
      %v168 = vmul.f32 %v165, 1.442695
      %v169 = vpow.pop %v168
      %v170 = vadd.f32 %v167, 1.0
      %v171 = vlog2.pop %v170
      %v172 = vmul.f32 %v171, 0.6931472
      %v173 = vmul.f32 -0.5, %v167
      %v174 = vadd.f32 %v173, 1.0
      %v175 = vmul.f32 %v174, %v167
      %v176 = vand.u32 2147483647, %v167
      %vm177 = vcmp.lt.f32.partialorder %v176, 0.0004427343
      %v178 = vsel %vm177, %v175, %v172
      %v179 = vadd.f32 %v169, 1.0
      %v180 = vlog2.pop %v179
      %v181 = vmul.f32 %v180, 0.6931472
      %v182 = vmul.f32 -0.5, %v169
      %v183 = vadd.f32 %v182, 1.0
      %v184 = vmul.f32 %v183, %v169
      %v185 = vand.u32 2147483647, %v169
      %vm186 = vcmp.lt.f32.partialorder %v185, 0.0004427343
      %v187 = vsel %vm186, %v184, %v181
      %vm188 = vcmp.ge.f32.partialorder %v158, 0.0
      %vm189 = vcmp.ge.f32.partialorder %v159, 0.0
      %v190 = vsub.f32 0.0, %v178
      %v191 = vsub.f32 0.0, %v187
      %v192 = vsub.f32 %v158, %v178
      %v193 = vsub.f32 %v159, %v187
      %v194 = vsel %vm188, %v190, %v192
      %v195 = vsel %vm189, %v191, %v193
      %v196 = vsel %vm188, 1.0, %v167
      %v197 = vsel %vm189, 1.0, %v169
      %v198 = vadd.f32 %v167, 1.0
      %v199 = vadd.f32 %v169, 1.0
      %v200 = vrcp.pop %v198
      %v201 = vrcp.pop %v199
      %v202 = vmul.f32 %v196, %v200
      %v203 = vmul.f32 %v197, %v201
      %v204 = vsub.f32 %v160, %v202
      %v205 = vsub.f32 %v161, %v203
      %v206 = vand.u32 2147483647, %v204
      %v207 = vand.u32 2147483647, %v205
      %v208 = vmul.f32 %v206, %v206
      %v209 = vmul.f32 %v207, %v207
      %v210 = vmul.f32 %v160, 0.0
      %v211 = vmul.f32 %v161, 0.0
      %v212 = vadd.f32 %v210, 0.5
      %v213 = vadd.f32 %v211, 0.5
      %v214 = vmul.f32 %v212, %v194
      %v215 = vmul.f32 %v213, %v195
      %v216 = vsub.f32 1.0, %v160
      %v217 = vsub.f32 1.0, %v161
      %v218 = vmul.f32 %v216, 0.5
      %v219 = vmul.f32 %v217, 0.5
      %v220 = vmul.f32 %v218, %v158
      %v221 = vmul.f32 %v219, %v159
      %v222 = vsub.f32 %v214, %v220
      %v223 = vsub.f32 %v215, %v221
      %v224 = vsub.f32 0.0, %v208
      %v225 = vsub.f32 0.0, %v209
      %v226 = vmul.f32 %v222, %v224
      %v227 = vmul.f32 %v223, %v225
      %v228 = vlaneseq
      %v229 = vshrl.u32 %v228, 7
      %v230 = vadd.s32 %v229, 8
      %v231 = vstv %s71
      %vm232 = vcmp.lt.s32.totalorder %v229, %v231
      %vm233 = vcmp.lt.s32.totalorder %v230, %v231
      %v234 = vsel %vm232, 1, 0
      %v235 = vsel %vm233, 1, 0
      %vm236 = vcmp.eq.s32.totalorder %v234, 1
      %vm237 = vcmp.eq.s32.totalorder %v235, 1
      %v238 = vsel %vm236, %v226, 0.0
      %v239 = vsel %vm237, %v227, 0.0
      %v240 = vadd.f32 %v238, %v239
      %v241 = vadd.f32 %v240, 0.0
      %v242 = vld [vmem:[#allocation7] sm:$0xff]
      %v243 = vadd.f32 %v242, %v241
      %244 = vst [vmem:[#allocation7] sm:$0xff] %v243
    $region29: #{tpu_custom_call.1} parent=1 // pred_fallthru
      _
    // Predicated region
    $region30: #{tpu_custom_call.1} parent=1 // pred_check
      _
    $region31: #{tpu_custom_call.1} parent=1 // pred_check_branch
      %246 = sbr.rel (0) target = $region33
    $region32: #{tpu_custom_call.1} parent=1 // pred_region
      %248 = vsyncadd [#allocation4], 0
      %s250 = sshll.u32 [#allocation7], 4
      %s251 = int_to_ptr.vmem [resolvable:$true] %s250
      %s252 = sshll.u32 %s2, 4
      %s253 = int_to_ptr.hbm [resolvable:$true] %s252
      %255 = dma.vmem_to_hbm [thread:$0]  %s251, 128, %s253, [#allocation4]
    $region33: #{tpu_custom_call.1} parent=1 // pred_fallthru
      _
    // Predicated region
    $region34: #{tpu_custom_call.1} parent=1 // pred_check
      _
    $region35: #{tpu_custom_call.1} parent=1 // pred_check_branch
      %257 = sbr.rel (0) target = $region37
    $region36: #{tpu_custom_call.1} parent=1 // pred_region
      %259 = dma.done [#allocation4], 128
    $region37: #{tpu_custom_call.1} parent=1 // pred_fallthru
      _
    %260 = vsyncpa [#allocation3], 1
    %261 = vsyncpa [#allocation6], 1
    %262 = vsyncpa [#allocation4], 1

</llo_original>
